<compile_context>
chip_gen: v6e
topology: v6e:2x2x1
jax: 0.10.0
libtpu: 0.0.40
codegen_flags: <defaults>
</compile_context>

<pallas_src>
import functools

import jax
import jax.numpy as jnp
from jax.experimental import pallas as pl
from jax.experimental.pallas import tpu as pltpu


def _round_up(x, m):
    return ((x + m - 1) // m) * m


def _cdiv(a, b):
    return (a + b - 1) // b


def _pad2d_zeros(x, rows, cols):
    r, c = x.shape
    if r == rows and c == cols:
        return x
    return jnp.pad(x, ((0, rows - r), (0, cols - c)))


def _pad2d_repeat_row0(x, rows, cols):
    """Pad cols with zeros, rows with copies of row 0 (a real candidate)."""
    r, c = x.shape
    if c != cols:
        x = jnp.pad(x, ((0, 0), (0, cols - c)))
    if r != rows:
        filler = jnp.broadcast_to(x[0:1], (rows - r, cols))
        x = jnp.concatenate([x, filler], axis=0)
    return x


def _tpu_topology():
    """Best-effort (num_tensorcores_per_chip, vmem_bytes_per_core) query."""
    num_cores, vmem_bytes = 1, 128 * 1024 * 1024
    try:
        info = pltpu.get_tpu_info()
        vmem_bytes = int(getattr(info, "vmem_capacity_bytes", vmem_bytes))
    except Exception:
        pass
    try:
        kind = str(getattr(jax.devices()[0], "device_kind", "")).lower()
        if "v7" in kind:
            num_cores = 2
    except Exception:
        pass
    # v7x: 64 MiB VMEM per TensorCore and 2 TCs/chip; v5e/v6e: 128 MiB, 1 TC.
    if vmem_bytes <= 64 * 1024 * 1024:
        num_cores = max(num_cores, 2)
    return num_cores, vmem_bytes


# ---------------------------------------------------------------------------
# Kernel: hardest-negative search.
#
# Grid = (anchor tiles, candidate tiles); the candidate axis is a reduction
# ("arbitrary").  Candidates arrive pre-transposed as (C, tk) so the MXU
# operand and the (tp, tk) similarity tile are lane-dense.  The running
# max-similarity / argmax live in VMEM scratch; the (tp,1) outputs are written
# only on the last candidate tile.
# ---------------------------------------------------------------------------
def _nn_kernel(a_ref, ct_ref, best_ref, idx_ref, best_sc, arg_sc):
    k = pl.program_id(1)
    tk = ct_ref.shape[1]

    # MXU: (tp, C) @ (C, tk) similarity tile, candidates on the lane axis.
    # Operands may be bf16; accumulate and compare in f32.
    xy = jnp.dot(a_ref[...], ct_ref[...], preferred_element_type=jnp.float32)

    # Row-wise max + first-occurrence argmax.  The column iota is (1, tk) and
    # broadcast inside the select; the global +k*tk offset is applied to the
    # (tp,1) result instead of the full tile.
    # TODO(synk): compare bundle dumps against jnp.max + jnp.argmax and keep
    # whichever has the lower VALU-slot count.
    local_best = jnp.max(xy, axis=1, keepdims=True)                    # (tp, 1)
    col = jax.lax.broadcasted_iota(jnp.int32, (1, tk), 1)              # (1, tk)
    big = jnp.int32(jnp.iinfo(jnp.int32).max)                          # sentinel; K*tk << 2^31
    local_arg = jnp.min(jnp.where(xy == local_best, col, big),
                        axis=1, keepdims=True) + k * tk                # (tp, 1)

    @pl.when(k == 0)
    def _():
        best_sc[...] = local_best
        arg_sc[...] = local_arg

    @pl.when(k > 0)
    def _():
        # Strict '>' keeps the earliest candidate tile on exact ties; within a
        # tile the iota-min keeps the earliest column -> first-occurrence
        # argmin semantics (distance is monotone decreasing in xy).
        better = local_best > best_sc[...]
        arg_sc[...] = jnp.where(better, local_arg, arg_sc[...])
        best_sc[...] = jnp.where(better, local_best, best_sc[...])

    @pl.when(k == pl.num_programs(1) - 1)
    def _():
        best_ref[...] = best_sc[...]
        idx_ref[...] = arg_sc[...]


def hardest_negative_search(anchor, cand, *, tp=None, tk=None, use_bf16=True):
    """For each anchor row: min normalized distance & argmin over all candidates.

    anchor: (P, C) unit-norm features.
    cand:   (K, C) unit-norm candidate features.

    Returns (nn_dist (P,), nn_idx (P,)).
    """
    P, C = anchor.shape
    K = cand.shape[0]
    num_cores, _ = _tpu_topology()

    mxu_dtype = jnp.bfloat16 if use_bf16 else jnp.float32
    p_align = 16 if use_bf16 else 8      # bf16 packs two rows per sublane
    c_align = 16 if use_bf16 else 8

    # --- generation-aware tile defaults -------------------------------------
    # tp is the HBM-traffic lever (candidates re-streamed once per anchor
    # tile); tk amortizes the ~0.35us per-grid-step overhead.  On v7x (2 TCs,
    # 64 MiB VMEM/TC) cap tp*tk at 256x4096 so (tp,tk) f32 intermediates stay
    # resident; on v5e/v6e (1 TC, 128 MiB) go wider and raise scoped VMEM.
    if tp is None:
        tp = 256 if num_cores >= 2 else 512
    if tk is None:
        tk = 4096
    vmem_limit = None if num_cores >= 2 else 96 * 1024 * 1024

    # --- anchor tiling: single tile on 1-TC chips, even >=2 tiles on v7x ----
    p_aligned = _round_up(max(P, 1), p_align)
    tp = _round_up(min(tp, p_aligned), p_align)
    n_tiles = max(1, _cdiv(p_aligned, tp))
    if num_cores >= 2:
        n_tiles = max(2, n_tiles)
        n_tiles += n_tiles % 2           # even tile count -> no idle TensorCore
    tp = _round_up(_cdiv(p_aligned, n_tiles), p_align)
    P_pad = n_tiles * tp

    # --- candidate / channel tiling ------------------------------------------
    tk = _round_up(min(tk, _round_up(K, 128)), 128)
    K_pad = _round_up(K, tk)
    C_pad = _round_up(C, c_align)        # zero channels don't change dot products

    # --- operand prep: one fused pad + cast + transpose per call -------------
    # Candidate tail rows are COPIES of row 0 (a real candidate) so the kernel
    # needs no per-step tail masking; duplicate columns sit at indices >= K and
    # can never win the first-occurrence argmax.
    anchor_p = _pad2d_zeros(anchor, P_pad, C_pad).astype(mxu_dtype)
    cand_t = _pad2d_repeat_row0(cand, K_pad, C_pad).astype(mxu_dtype).T  # (C_pad, K_pad)

    cp_kwargs = dict(dimension_semantics=("parallel", "arbitrary"))
    if vmem_limit is not None:
        cp_kwargs["vmem_limit_bytes"] = vmem_limit

    # TODO(synk): if bundle dumps show the candidate DMA exposed after the bf16
    # + VPU-pass reductions, add pipeline_mode=pl.Buffered(3) on the candidate
    # BlockSpec (cheap: C*tk*2 bytes per extra buffer).
    outs = pl.pallas_call(
        _nn_kernel,
        out_shape=(jax.ShapeDtypeStruct((P_pad, 1), jnp.float32),
                   jax.ShapeDtypeStruct((P_pad, 1), jnp.int32)),
        grid_spec=pltpu.PrefetchScalarGridSpec(
            num_scalar_prefetch=0,
            grid=(P_pad // tp, K_pad // tk),
            in_specs=[pl.BlockSpec((tp, C_pad), lambda i, k: (i, 0)),
                      pl.BlockSpec((C_pad, tk), lambda i, k: (0, k))],
            out_specs=[pl.BlockSpec((tp, 1), lambda i, k: (i, 0)),
                       pl.BlockSpec((tp, 1), lambda i, k: (i, 0))],
            scratch_shapes=[pltpu.VMEM((tp, 1), jnp.float32),
                            pltpu.VMEM((tp, 1), jnp.int32)]),
        compiler_params=pltpu.CompilerParams(**cp_kwargs),
    )(anchor_p, cand_t)

    best_xy = outs[0][:P, 0]
    nn_idx = outs[1][:P, 0]
    # Deferred distance math: one sqrt over P values instead of P*K inside the
    # k-loop (min distance == max similarity for normalized features).
    nn_dist = jnp.sqrt(jnp.maximum(2.0 - 2.0 * best_xy, 0.0))
    return nn_dist, nn_idx


# ---------------------------------------------------------------------------
# Full forward pass (mirrors HardestContrastiveLoss.forward).
# ---------------------------------------------------------------------------
@functools.partial(jax.jit,
                   static_argnames=("pos_thresh", "neg_thresh", "use_bf16"))
def hardest_contrastive_loss(feats0, feats1, pos_pairs, *,
                             pos_thresh=0.1, neg_thresh=1.4, use_bf16=True):
    # num_pos_pairs >= P and num_candidates >= max(N, M): sampling = "take all";
    # candidate indices are arange, so NN indices map to themselves.
    anchor_idx0 = pos_pairs[:, 0]
    anchor_idx1 = pos_pairs[:, 1]
    anchor_feats0 = feats0[anchor_idx0]
    anchor_feats1 = feats1[anchor_idx1]

    # Direction 0: anchors from cloud 0 vs candidates = feats1.
    nn_dist0, nn_idx0 = hardest_negative_search(anchor_feats0, feats1,
                                                use_bf16=use_bf16)
    # Direction 1: anchors from cloud 1 vs candidates = feats0.
    nn_dist1, nn_idx1 = hardest_negative_search(anchor_feats1, feats0,
                                                use_bf16=use_bf16)

    # Positive-pair distance: O(P*C) elementwise in f32 (negligible vs the
    # P*K*C search), kept out of the kernel so pos_loss precision does not
    # depend on the bf16 MXU knob.
    pos_dist = jnp.linalg.norm(anchor_feats0 - anchor_feats1, axis=1)

    # Exclude true positive pairs from the negative sets.  Equivalent to the
    # module's ~np.isin(_hash(pairs), _hash(pos_pairs)) since that hash is
    # collision-free; the direct pair comparison also avoids int32 overflow
    # for very large point clouds.
    pp0 = pos_pairs[:, 0][None, :]
    pp1 = pos_pairs[:, 1][None, :]
    neg_mask0 = ~jnp.any((anchor_idx0[:, None] == pp0) &
                         (nn_idx0[:, None] == pp1), axis=1)
    neg_mask1 = ~jnp.any((nn_idx1[:, None] == pp0) &
                         (anchor_idx1[:, None] == pp1), axis=1)

    pos_loss = jnp.mean(jnp.square(jax.nn.relu(pos_dist - pos_thresh)))
    neg_vals0 = jnp.square(jax.nn.relu(neg_thresh - nn_dist0))
    neg_vals1 = jnp.square(jax.nn.relu(neg_thresh - nn_dist1))
    m0 = neg_mask0.astype(jnp.float32)
    m1 = neg_mask1.astype(jnp.float32)
    # Mean over selected negatives (NaN when empty, same as torch .mean()).
    neg_loss0 = jnp.sum(neg_vals0 * m0) / jnp.sum(m0)
    neg_loss1 = jnp.sum(neg_vals1 * m1) / jnp.sum(m1)
    neg_loss = 0.5 * (neg_loss0 + neg_loss1)
    total_loss = pos_loss + neg_loss
    return {"loss": total_loss, "pos_loss": pos_loss, "neg_loss": neg_loss}


# ---------------------------------------------------------------------------
# Pure-JAX reference (same math, no Pallas) used as a sanity check.
# ---------------------------------------------------------------------------
def _reference(feats0, feats1, pos_pairs, pos_thresh, neg_thresh):
    N, M = feats0.shape[0], feats1.shape[0]
    hash_seed = max(N, M)
    a0 = feats0[pos_pairs[:, 0]]
    a1 = feats1[pos_pairs[:, 1]]
    d0 = jnp.sqrt(jnp.maximum(2.0 - 2.0 * a0 @ feats1.T, 0.0))
    d1 = jnp.sqrt(jnp.maximum(2.0 - 2.0 * a1 @ feats0.T, 0.0))
    nn_d0, nn_i0 = jnp.min(d0, 1), jnp.argmin(d0, 1)
    nn_d1, nn_i1 = jnp.min(d1, 1), jnp.argmin(d1, 1)
    pos_keys = pos_pairs[:, 0] + pos_pairs[:, 1] * hash_seed
    k0 = pos_pairs[:, 0] + nn_i0 * hash_seed
    k1 = nn_i1 + pos_pairs[:, 1] * hash_seed
    nm0 = ~jnp.any(k0[:, None] == pos_keys[None, :], 1)
    nm1 = ~jnp.any(k1[:, None] == pos_keys[None, :], 1)
    pd = jnp.linalg.norm(a0 - a1, axis=1)
    pos_loss = jnp.mean(jnp.square(jax.nn.relu(pd - pos_thresh)))
    n0 = jnp.sum(jnp.square(jax.nn.relu(neg_thresh - nn_d0)) * nm0) / jnp.sum(nm0)
    n1 = jnp.sum(jnp.square(jax.nn.relu(neg_thresh - nn_d1)) * nm1) / jnp.sum(nm1)
    neg_loss = (n0 + n1) / 2.0
    return pos_loss + neg_loss, pos_loss, neg_loss


if __name__ == "__main__":
    key = jax.random.PRNGKey(0)
    k0, k1, k2 = jax.random.split(key, 3)

    N, M, C, P = 64, 64, 32, 16  # small shapes
    feats0 = jax.random.normal(k0, (N, C), dtype=jnp.float32)
    feats1 = jax.random.normal(k1, (M, C), dtype=jnp.float32)
    # normalized=True path of pairwise_distance assumes unit-norm features.
    feats0 = feats0 / jnp.linalg.norm(feats0, axis=1, keepdims=True)
    feats1 = feats1 / jnp.linalg.norm(feats1, axis=1, keepdims=True)
    pos_pairs = jnp.stack(
        [jax.random.randint(k2, (P,), 0, N, dtype=jnp.int32),
         jax.random.permutation(k2, M)[:P].astype(jnp.int32)], axis=1)

    ref_total, ref_pos, ref_neg = _reference(feats0, feats1, pos_pairs, 0.1, 1.4)

    # Exact path (f32 MXU operands): must match the pure-JAX reference tightly.
    out_f32 = hardest_contrastive_loss(feats0, feats1, pos_pairs,
                                       pos_thresh=0.1, neg_thresh=1.4,
                                       use_bf16=False)
    jax.block_until_ready(out_f32)
    assert jnp.allclose(out_f32["loss"], ref_total, atol=1e-5, rtol=1e-5)
    assert jnp.allclose(out_f32["pos_loss"], ref_pos, atol=1e-5, rtol=1e-5)
    assert jnp.allclose(out_f32["neg_loss"], ref_neg, atol=1e-5, rtol=1e-5)

    # Fast path (bf16 MXU operands, the default): loose check only -- the
    # hardest negative can legitimately flip on near-ties under bf16 rounding.
    out_bf16 = hardest_contrastive_loss(feats0, feats1, pos_pairs,
                                        pos_thresh=0.1, neg_thresh=1.4)
    jax.block_until_ready(out_bf16)
    assert jnp.allclose(out_bf16["pos_loss"], ref_pos, atol=1e-5, rtol=1e-5)
    assert jnp.allclose(out_bf16["loss"], ref_total, atol=5e-2, rtol=5e-2)

    print("KERNEL_OK")
</pallas_src>

<mosaic_0001>
module attributes {stable_mosaic.version = 11 : i64} {
  func.func @_nn_kernel(%arg0: i32, %arg1: i32, %arg2: memref<16x32xf32, #tpu.memory_space<vmem>>, %arg3: memref<32x128xf32, #tpu.memory_space<vmem>>, %arg4: memref<16x1xf32, #tpu.memory_space<vmem>>, %arg5: memref<16x1xi32, #tpu.memory_space<vmem>>, %arg6: memref<16x1xf32, #tpu.memory_space<vmem>>, %arg7: memref<16x1xi32, #tpu.memory_space<vmem>>) attributes {dimension_semantics = [#tpu.dimension_semantics<parallel>, #tpu.dimension_semantics<arbitrary>], iteration_bounds = array<i64: 1, 1>, scalar_prefetch = 0 : i64, scratch_operands = 2 : i64, tpu.core_type = #tpu.core_type<tc>, window_params = [{transform_indices = @transform_0, window_bounds = array<i64: 16, 32>}, {transform_indices = @transform_1, window_bounds = array<i64: 32, 128>}, {transform_indices = @transform_2, window_bounds = array<i64: 16, 1>}, {transform_indices = @transform_3, window_bounds = array<i64: 16, 1>}]} {
    %c0 = arith.constant 0 : index
    %c0_0 = arith.constant 0 : index
    %0 = vector.load %arg2[%c0, %c0_0] : memref<16x32xf32, #tpu.memory_space<vmem>>, vector<16x32xf32>
    %c0_1 = arith.constant 0 : index
    %c0_2 = arith.constant 0 : index
    %1 = vector.load %arg3[%c0_1, %c0_2] : memref<32x128xf32, #tpu.memory_space<vmem>>, vector<32x128xf32>
    %cst = arith.constant dense<0.000000e+00> : vector<16x128xf32>
    %2 = tpu.matmul %0, %1, %cst {dimension_numbers = #tpu.dot_dimension_numbers<[1], [0], [0], [1], [0, 0, 1, 1], [], []>} : vector<16x32xf32>, vector<32x128xf32>, vector<16x128xf32> -> vector<16x128xf32>
    %cst_3 = arith.constant dense<0xFF800000> : vector<16xf32>
    %3 = vector.multi_reduction <maximumf>, %2, %cst_3 [1] : vector<16x128xf32> to vector<16xf32>
    %4 = vector.shape_cast %3 : vector<16xf32> to vector<16x1xf32>
    %5 = tpu.iota {dimensions = array<i32: 1>} : vector<1x128xi32>
    %6 = vector.broadcast %4 : vector<16x1xf32> to vector<16x128xf32>
    %7 = arith.cmpf oeq, %2, %6 : vector<16x128xf32>
    %c2147483647_i32 = arith.constant 2147483647 : i32
    %8 = vector.shape_cast %5 : vector<1x128xi32> to vector<1x128xi32>
    %9 = vector.broadcast %8 : vector<1x128xi32> to vector<16x128xi32>
    %10 = vector.broadcast %c2147483647_i32 : i32 to vector<16x128xi32>
    %11 = arith.select %7, %9, %10 : vector<16x128xi1>, vector<16x128xi32>
    %cst_4 = arith.constant dense<2147483647> : vector<16xi32>
    %12 = vector.multi_reduction <minsi>, %11, %cst_4 [1] : vector<16x128xi32> to vector<16xi32>
    %13 = vector.shape_cast %12 : vector<16xi32> to vector<16x1xi32>
    %c128_i32 = arith.constant 128 : i32
    %14 = arith.muli %arg1, %c128_i32 : i32
    %15 = vector.broadcast %14 : i32 to vector<16x1xi32>
    %16 = arith.addi %13, %15 : vector<16x1xi32>
    %c0_i32 = arith.constant 0 : i32
    %17 = arith.cmpi eq, %arg1, %c0_i32 : i32
    %18 = arith.extui %17 : i1 to i32
    %c0_i32_5 = arith.constant 0 : i32
    %19 = arith.cmpi ne, %18, %c0_i32_5 : i32
    scf.if %19 {
      %c0_10 = arith.constant 0 : index
      %c0_11 = arith.constant 0 : index
      %26 = vector.load %arg6[%c0_10, %c0_11] : memref<16x1xf32, #tpu.memory_space<vmem>>, vector<16x1xf32>
      tpu.vector_store %arg6[%c0_10, %c0_11], %4 {strides = array<i32>} : memref<16x1xf32, #tpu.memory_space<vmem>>, vector<16x1xf32>,
      %c0_12 = arith.constant 0 : index
      %c0_13 = arith.constant 0 : index
      %27 = vector.load %arg7[%c0_12, %c0_13] : memref<16x1xi32, #tpu.memory_space<vmem>>, vector<16x1xi32>
      tpu.vector_store %arg7[%c0_12, %c0_13], %16 {strides = array<i32>} : memref<16x1xi32, #tpu.memory_space<vmem>>, vector<16x1xi32>,
    } else {
    }
    %c0_i32_6 = arith.constant 0 : i32
    %20 = arith.cmpi sgt, %arg1, %c0_i32_6 : i32
    %21 = arith.extui %20 : i1 to i32
    %c0_i32_7 = arith.constant 0 : i32
    %22 = arith.cmpi ne, %21, %c0_i32_7 : i32
    scf.if %22 {
      %c0_10 = arith.constant 0 : index
      %c0_11 = arith.constant 0 : index
      %26 = vector.load %arg6[%c0_10, %c0_11] : memref<16x1xf32, #tpu.memory_space<vmem>>, vector<16x1xf32>
      %27 = arith.cmpf ogt, %4, %26 : vector<16x1xf32>
      %c0_12 = arith.constant 0 : index
      %c0_13 = arith.constant 0 : index
      %28 = vector.load %arg7[%c0_12, %c0_13] : memref<16x1xi32, #tpu.memory_space<vmem>>, vector<16x1xi32>
      %29 = arith.select %27, %16, %28 : vector<16x1xi1>, vector<16x1xi32>
      %c0_14 = arith.constant 0 : index
      %c0_15 = arith.constant 0 : index
      %30 = vector.load %arg7[%c0_14, %c0_15] : memref<16x1xi32, #tpu.memory_space<vmem>>, vector<16x1xi32>
      tpu.vector_store %arg7[%c0_14, %c0_15], %29 {strides = array<i32>} : memref<16x1xi32, #tpu.memory_space<vmem>>, vector<16x1xi32>,
      %c0_16 = arith.constant 0 : index
      %c0_17 = arith.constant 0 : index
      %31 = vector.load %arg6[%c0_16, %c0_17] : memref<16x1xf32, #tpu.memory_space<vmem>>, vector<16x1xf32>
      %32 = arith.select %27, %4, %31 : vector<16x1xi1>, vector<16x1xf32>
      %c0_18 = arith.constant 0 : index
      %c0_19 = arith.constant 0 : index
      %33 = vector.load %arg6[%c0_18, %c0_19] : memref<16x1xf32, #tpu.memory_space<vmem>>, vector<16x1xf32>
      tpu.vector_store %arg6[%c0_18, %c0_19], %32 {strides = array<i32>} : memref<16x1xf32, #tpu.memory_space<vmem>>, vector<16x1xf32>,
    } else {
    }
    %c0_i32_8 = arith.constant 0 : i32
    %23 = arith.cmpi eq, %arg1, %c0_i32_8 : i32
    %24 = arith.extui %23 : i1 to i32
    %c0_i32_9 = arith.constant 0 : i32
    %25 = arith.cmpi ne, %24, %c0_i32_9 : i32
    scf.if %25 {
      %c0_10 = arith.constant 0 : index
      %c0_11 = arith.constant 0 : index
      %26 = vector.load %arg6[%c0_10, %c0_11] : memref<16x1xf32, #tpu.memory_space<vmem>>, vector<16x1xf32>
      %c0_12 = arith.constant 0 : index
      %c0_13 = arith.constant 0 : index
      %27 = vector.load %arg4[%c0_12, %c0_13] : memref<16x1xf32, #tpu.memory_space<vmem>>, vector<16x1xf32>
      tpu.vector_store %arg4[%c0_12, %c0_13], %26 {strides = array<i32>} : memref<16x1xf32, #tpu.memory_space<vmem>>, vector<16x1xf32>,
      %c0_14 = arith.constant 0 : index
      %c0_15 = arith.constant 0 : index
      %28 = vector.load %arg7[%c0_14, %c0_15] : memref<16x1xi32, #tpu.memory_space<vmem>>, vector<16x1xi32>
      %c0_16 = arith.constant 0 : index
      %c0_17 = arith.constant 0 : index
      %29 = vector.load %arg5[%c0_16, %c0_17] : memref<16x1xi32, #tpu.memory_space<vmem>>, vector<16x1xi32>
      tpu.vector_store %arg5[%c0_16, %c0_17], %28 {strides = array<i32>} : memref<16x1xi32, #tpu.memory_space<vmem>>, vector<16x1xi32>,
    } else {
    }
    return
  }
  func.func @transform_0(%arg0: i32, %arg1: i32) -> (i32, i32) {
    %c0_i32 = arith.constant 0 : i32
    %c0_i32_0 = arith.constant 0 : i32
    return %arg0, %c0_i32 : i32, i32
  }
  func.func @transform_1(%arg0: i32, %arg1: i32) -> (i32, i32) {
    %c0_i32 = arith.constant 0 : i32
    %c0_i32_0 = arith.constant 0 : i32
    return %c0_i32, %arg1 : i32, i32
  }
  func.func @transform_2(%arg0: i32, %arg1: i32) -> (i32, i32) {
    %c0_i32 = arith.constant 0 : i32
    %c0_i32_0 = arith.constant 0 : i32
    return %arg0, %c0_i32 : i32, i32
  }
  func.func @transform_3(%arg0: i32, %arg1: i32) -> (i32, i32) {
    %c0_i32 = arith.constant 0 : i32
    %c0_i32_0 = arith.constant 0 : i32
    return %arg0, %c0_i32 : i32, i32
  }
}

</mosaic_0001>

<llo_original>
// kernel: hardest_contrastive_loss.3
$region0: #{hardest_contrastive_loss.3}
  #allocation0 [shape = 'u32[]', space=smem, size = 0x4, offset = 0x4, fixed_abs, tag = 'smem constant byte address 0x4 - core index']
  #allocation1 [shape = 'u32[144,128]{1,0:T(1,128)}', space=vmem, size = 0x12000, scoped, tag = 'internal scratch']
  #allocation2 [shape = 'f32[16,1]{1,0:T(8,128)}', space=vmem, size = 0x2000, scoped, tag = 'scratch operand']
  #allocation3 [shape = 's32[16,1]{1,0:T(8,128)}', space=vmem, size = 0x2000, scoped, tag = 'scratch operand']
  %s0 = inlined_call_operand.vmem [shape: f32[16,32], index: 0, kind: input, shape index: {}]
  %s1 = inlined_call_operand.vmem [shape: f32[32,128], index: 1, kind: input, shape index: {}]
  %s2 = inlined_call_operand.vmem [shape: f32[16,1], index: 2, kind: output, shape index: {0}]
  %s3 = inlined_call_operand.vmem [shape: s32[16,1], index: 3, kind: output, shape index: {1}]
  %4 = xla_tuple %s2, %s3
  %s5 = sld [smem:[#allocation0]]
  $region38: #{hardest_contrastive_loss.3} parent=0
    _
  %s7 = ssub.s32 1, %s5
  %s8 = scalar_select 0, %s7, %s5
  // Predicated region
  $region2: #{hardest_contrastive_loss.3} parent=0 // pred_check
    _
  $region3: #{hardest_contrastive_loss.3} parent=0 // pred_check_branch
    %10 = sbr.rel (0) target = $region5
  $region4: #{hardest_contrastive_loss.3} parent=0 // pred_region
    _
  $region5: #{hardest_contrastive_loss.3} parent=0 // pred_fallthru
    _
  // Predicated region
  $region6: #{hardest_contrastive_loss.3} parent=0 // pred_check
    _
  $region7: #{hardest_contrastive_loss.3} parent=0 // pred_check_branch
    %12 = sbr.rel (0) target = $region9
  $region8: #{hardest_contrastive_loss.3} parent=0 // pred_region
    _
  $region9: #{hardest_contrastive_loss.3} parent=0 // pred_fallthru
    _
  %v13 = vld [vmem:[%s0] sm:$0xff]
  %v14 = vld [vmem:[%s0 + $0x8] sm:$0xff]
  %v15 = vld [vmem:[%s1] sm:$0xff]
  %v16 = vld [vmem:[%s1 + $0x8] sm:$0xff]
  %v17 = vld [vmem:[%s1 + $0x10] sm:$0xff]
  %v18 = vld [vmem:[%s1 + $0x18] sm:$0xff]
  %vm19 = vcmask 261120
  %v21 = vsel %vm19, %v13, 0
  %v24 = vsel %vm19, %v14, 0
  %26 = vmatprep.subr.mxu0 0.0
  %27 = vmatpush1.msra.mxu0 0.0
  %28 = vmatprep.subr.mxu0 0.0
  %29 = vmatpush1.msra.mxu0 0.0
  %30 = vmatprep.subr.mxu0 0.0
  %31 = vmatpush1.msra.mxu0 0.0
  %32 = vmatprep.subr.mxu0 0.0
  %33 = vmatpush1.msra.mxu0 0.0
  %34 = vmatprep.subr.mxu0 0.0
  %35 = vmatpush1.msra.mxu0 0.0
  %36 = vmatprep.subr.mxu0 0.0
  %37 = vmatpush1.msra.mxu0 0.0
  %38 = vmatprep.subr.mxu0 0.0
  %39 = vmatpush1.msra.mxu0 0.0
  %40 = vmatprep.subr.mxu0 0.0
  %41 = vmatpush1.msra.mxu0 0.0
  %42 = vmatprep.subr.mxu0 0.0
  %43 = vmatpush1.msra.mxu0 0.0
  %44 = vmatprep.subr.mxu0 0.0
  %45 = vmatpush1.msra.mxu0 0.0
  %46 = vmatprep.subr.mxu0 0.0
  %47 = vmatpush1.msra.mxu0 0.0
  %48 = vmatprep.subr.mxu0 0.0
  %49 = vmatpush1.msra.mxu0 0.0
  %50 = vmatprep.subr.mxu0 0.0
  %51 = vmatpush1.msra.mxu0 %v18
  %52 = vmatprep.subr.mxu0 0.0
  %53 = vmatpush1.msra.mxu0 %v17
  %54 = vmatprep.subr.mxu0 0.0
  %55 = vmatpush1.msra.mxu0 %v16
  %56 = vmatprep.subr.mxu0 0.0
  %57 = vmatpush1.msra.mxu0 %v15
  %58 = vmatprep.subr.mxu0 0.0
  %59 = vmatpush2.msra.mxu0 0.0
  %60 = vmatprep.subr.mxu0 0.0
  %61 = vmatpush2.msra.mxu0 0.0
  %62 = vmatprep.subr.mxu0 0.0
  %63 = vmatpush2.msra.mxu0 0.0
  %64 = vmatprep.subr.mxu0 0.0
  %65 = vmatpush2.msra.mxu0 0.0
  %66 = vmatprep.subr.mxu0 0.0
  %67 = vmatpush2.msra.mxu0 0.0
  %68 = vmatprep.subr.mxu0 0.0
  %69 = vmatpush2.msra.mxu0 0.0
  %70 = vmatprep.subr.mxu0 0.0
  %71 = vmatpush2.msra.mxu0 0.0
  %72 = vmatprep.subr.mxu0 0.0
  %73 = vmatpush2.msra.mxu0 0.0
  %74 = vmatprep.subr.mxu0 0.0
  %75 = vmatpush2.msra.mxu0 0.0
  %76 = vmatprep.subr.mxu0 0.0
  %77 = vmatpush2.msra.mxu0 0.0
  %78 = vmatprep.subr.mxu0 0.0
  %79 = vmatpush2.msra.mxu0 0.0
  %80 = vmatprep.subr.mxu0 0.0
  %81 = vmatpush2.msra.mxu0 0.0
  %82 = vmatprep.subr.mxu0 0.0
  %83 = vmatpush2.msra.mxu0 0.0
  %84 = vmatprep.subr.mxu0 0.0
  %85 = vmatpush2.msra.mxu0 0.0
  %86 = vmatprep.subr.mxu0 0.0
  %87 = vmatpush2.msra.mxu0 0.0
  %88 = vmatprep.subr.mxu0 0.0
  %89 = vmatpush2.msra.mxu0 0.0
  %90 = vmatprep.mubr.f32.mxu0 0.0
  %91 = vmatmul.mubr.f32.gmra.mxu0 %v21
  %v92 = vpop.f32.mrf.mxu0
  %v93 = vadd.f32 0.0, %v92
  %v94 = vpop.f32.mrf.mxu0
  %95 = vmatprep.mubr.f32.mxu0 0.0
  %96 = vmatmul.mubr.f32.gmra.mxu0 %v24
  %v97 = vpop.f32.mrf.mxu0
  %v98 = vadd.f32 0.0, %v97
  %v99 = vpop.f32.mrf.mxu0
  %100 = vdwg.mxu0
  %101 = vmax.xlane.f32.xlu0 %v93
  %v102 = vpop.xlane.xlu0 %101
  %103 = vmax.xlane.f32.xlu0 %v98
  %v104 = vpop.xlane.xlu0 %103
  %v105 = vlaneseq
  %v106 = vand.u32 %v105, 127
  %vm107 = vcmp.eq.f32.partialorder %v93, %v102
  %vm108 = vcmp.eq.f32.partialorder %v98, %v104
  %v109 = vsel %vm107, %v106, 2147483647
  %v110 = vsel %vm108, %v106, 2147483647
  %v111 = vand.u32 %v109, 65535
  %v112 = vshra.s32 %v109, 16
  %v113 = vcvt.s32.f32 %v111
  %v114 = vcvt.s32.f32 %v112
  %115 = vmin.xlane.f32.xlu0 %v114
  %v116 = vpop.xlane.xlu0 %115
  %vm117 = vcmp.eq.f32.partialorder %v114, %v116
  %v118 = vsel %vm117, %v113, inf
  %119 = vmin.xlane.f32.xlu0 %v118
  %v120 = vpop.xlane.xlu0 %119
  %v121 = vcvt.f32.s32 %v120
  %v122 = vcvt.f32.s32 %v116
  %v123 = vshll.u32 %v122, 16
  %v124 = vadd.s32 %v123, %v121
  %v125 = vand.u32 %v110, 65535
  %v126 = vshra.s32 %v110, 16
  %v127 = vcvt.s32.f32 %v125
  %v128 = vcvt.s32.f32 %v126
  %129 = vmin.xlane.f32.xlu0 %v128
  %v130 = vpop.xlane.xlu0 %129
  %vm131 = vcmp.eq.f32.partialorder %v128, %v130
  %v132 = vsel %vm131, %v127, inf
  %133 = vmin.xlane.f32.xlu0 %v132
  %v134 = vpop.xlane.xlu0 %133
  %v135 = vcvt.f32.s32 %v134
  %v136 = vcvt.f32.s32 %v130
  %v137 = vshll.u32 %v136, 16
  %v138 = vadd.s32 %v137, %v135
  %s139 = smul.u32 0, 128
  %v140 = vstv %s139
  %v141 = vadd.s32 %v124, %v140
  %v142 = vadd.s32 %v138, %v140
  %p143 = scmp.eq.s32.totalorder 0, 0
  // Predicated region
  $region10: #{hardest_contrastive_loss.3} parent=0 // pred_check
    %p144 = pneg %p143
  $region11: #{hardest_contrastive_loss.3} parent=0 // pred_check_branch
    %146 = sbr.rel (%p144) target = $region13
  $region12: #{hardest_contrastive_loss.3} parent=0 // pred_region
    %vm147 = vcmask 7168
    %148 = vst.msk [vmem:[#allocation2] sm:$0xff] %vm147, %v102
    %149 = vst.msk [vmem:[#allocation2 + $0x8] sm:$0xff] %vm147, %v104
    %150 = vst.msk [vmem:[#allocation3] sm:$0xff] %vm147, %v141
    %151 = vst.msk [vmem:[#allocation3 + $0x8] sm:$0xff] %vm147, %v142
  $region13: #{hardest_contrastive_loss.3} parent=0 // pred_fallthru
    _
  %p152 = scmp.gt.s32.totalorder 0, 0
  // Predicated region
  $region14: #{hardest_contrastive_loss.3} parent=0 // pred_check
    %p153 = pneg %p152
  $region15: #{hardest_contrastive_loss.3} parent=0 // pred_check_branch
    %155 = sbr.rel (%p153) target = $region17
  $region16: #{hardest_contrastive_loss.3} parent=0 // pred_region
    %v156 = vld [vmem:[#allocation2] sm:$0xff]
    %v157 = vld [vmem:[#allocation2 + $0x8] sm:$0xff]
    %vm158 = vcmp.gt.f32.partialorder %v102, %v156
    %vm159 = vcmp.gt.f32.partialorder %v104, %v157
    %v160 = vld [vmem:[#allocation3] sm:$0xff]
    %v161 = vld [vmem:[#allocation3 + $0x8] sm:$0xff]
    %v162 = vsel %vm158, %v141, %v160
    %v163 = vsel %vm159, %v142, %v161
    %vm164 = vcmask 7168
    %165 = vst.msk [vmem:[#allocation3] sm:$0xff] %vm164, %v162
    %166 = vst.msk [vmem:[#allocation3 + $0x8] sm:$0xff] %vm164, %v163
    %v167 = vld [vmem:[#allocation2] sm:$0xff]
    %v168 = vld [vmem:[#allocation2 + $0x8] sm:$0xff]
    %v169 = vsel %vm158, %v102, %v167
    %v170 = vsel %vm159, %v104, %v168
    %171 = vst.msk [vmem:[#allocation2] sm:$0xff] %vm164, %v169
    %172 = vst.msk [vmem:[#allocation2 + $0x8] sm:$0xff] %vm164, %v170
  $region17: #{hardest_contrastive_loss.3} parent=0 // pred_fallthru
    _
  // Predicated region
  $region18: #{hardest_contrastive_loss.3} parent=0 // pred_check
    %p173 = pneg %p143
  $region19: #{hardest_contrastive_loss.3} parent=0 // pred_check_branch
    %175 = sbr.rel (%p173) target = $region21
  $region20: #{hardest_contrastive_loss.3} parent=0 // pred_region
    %v176 = vld [vmem:[#allocation2] sm:$0xff]
    %v177 = vld [vmem:[#allocation2 + $0x8] sm:$0xff]
    %vm178 = vcmask 7168
    %179 = vst.msk [vmem:[%s2] sm:$0xff] %vm178, %v176
    %180 = vst.msk [vmem:[%s2 + $0x8] sm:$0xff] %vm178, %v177
    %v181 = vld [vmem:[#allocation3] sm:$0xff]
    %v182 = vld [vmem:[#allocation3 + $0x8] sm:$0xff]
    %183 = vst.msk [vmem:[%s3] sm:$0xff] %vm178, %v181
    %184 = vst.msk [vmem:[%s3 + $0x8] sm:$0xff] %vm178, %v182
  $region21: #{hardest_contrastive_loss.3} parent=0 // pred_fallthru
    _
  // Predicated region
  $region22: #{hardest_contrastive_loss.3} parent=0 // pred_check
    _
  $region23: #{hardest_contrastive_loss.3} parent=0 // pred_check_branch
    %186 = sbr.rel (0) target = $region25
  $region24: #{hardest_contrastive_loss.3} parent=0 // pred_region
    _
  $region25: #{hardest_contrastive_loss.3} parent=0 // pred_fallthru
    _
  // Predicated region
  $region26: #{hardest_contrastive_loss.3} parent=0 // pred_check
    _
  $region27: #{hardest_contrastive_loss.3} parent=0 // pred_check_branch
    %188 = sbr.rel (0) target = $region29
  $region28: #{hardest_contrastive_loss.3} parent=0 // pred_region
    _
  $region29: #{hardest_contrastive_loss.3} parent=0 // pred_fallthru
    _
  // Predicated region
  $region30: #{hardest_contrastive_loss.3} parent=0 // pred_check
    _
  $region31: #{hardest_contrastive_loss.3} parent=0 // pred_check_branch
    %190 = sbr.rel (0) target = $region33
  $region32: #{hardest_contrastive_loss.3} parent=0 // pred_region
    _
  $region33: #{hardest_contrastive_loss.3} parent=0 // pred_fallthru
    _
  // Predicated region
  $region34: #{hardest_contrastive_loss.3} parent=0 // pred_check
    _
  $region35: #{hardest_contrastive_loss.3} parent=0 // pred_check_branch
    %192 = sbr.rel (0) target = $region37
  $region36: #{hardest_contrastive_loss.3} parent=0 // pred_region
    _
  $region37: #{hardest_contrastive_loss.3} parent=0 // pred_fallthru
    _

</llo_original>
